<compile_context>
chip_gen: v6e
topology: v6e:2x2x1
jax: 0.10.0
libtpu: 0.0.40
codegen_flags: <defaults>
</compile_context>

<pallas_src>
import math
import jax
import jax.numpy as jnp
from jax.experimental import pallas as pl
from jax.experimental.pallas import tpu as pltpu


def _weight_layer_kernel(w_ref, x_ref, o_ref):
    # w_ref: (1, TL)  lane-dense per-element weight (channel weight repeated L times)
    # x_ref: (TR, TL) tile of the flattened (B, C*L) input
    w = w_ref[...]                       # broadcasts over rows (sublanes) on the VPU
    # out = x * w + w  (PyTorch forward uses weight for both scale and bias)
    o_ref[...] = (x_ref[...] * w + w).astype(o_ref.dtype)


def _round_up(v, m):
    return ((v + m - 1) // m) * m


def _round_down(v, m):
    return max(m, (v // m) * m)


def weight_layer(x, weight, *, tile_bytes=4 * 1024 * 1024, alias_input=False):
    """x: (B, C, L) activations, weight: (C,) per-channel parameter.

    Returns x * w[None, :, None] + w[None, :, None] with JAX dtype promotion
    between x and weight (matches the float-only PyTorch use).
    """
    B, C, L = x.shape
    Ltot = C * L
    out_dtype = jnp.result_type(x.dtype, weight.dtype)

    # Lane-dense flattening: row-major (C, L) -> C*L, so channel c occupies
    # lanes [c*L, (c+1)*L).  Pre-repeat the weight once to match that layout.
    x2 = x.reshape(B, Ltot)
    w_row = jnp.repeat(weight, L).reshape(1, Ltot)

    in_itemsize = jnp.dtype(x.dtype).itemsize
    out_itemsize = jnp.dtype(out_dtype).itemsize
    itemsize = max(in_itemsize, out_itemsize)
    # Sublane multiple for partial row tiles: 8 (f32), 16 (bf16/f16), 32 (8-bit).
    sub = max(8, 32 // min(in_itemsize, out_itemsize))

    row_bytes = Ltot * itemsize
    if row_bytes * sub <= tile_bytes or Ltot <= 128:
        # Preferred path: full (contiguous) lane rows; shrink the row count to
        # respect the per-tile byte budget.
        tl = Ltot
        rows_fit = max(sub, tile_bytes // max(row_bytes, 1))
        tr = B if rows_fit >= B else _round_down(rows_fit, sub)
    else:
        # A single full row already exceeds the tile budget: cut lanes at a
        # 128-multiple and keep the minimum sublane-aligned row count.
        tr = min(B, sub)
        tl = _round_down(tile_bytes // (tr * itemsize), 128)
        tl = min(tl, _round_down(Ltot, 128))

    # v7x occupancy: ensure the "parallel" row axis has >= 2 steps when the
    # problem is big enough for both TensorCores to have useful work.
    total_bytes = B * Ltot * itemsize
    if tr == B and tl == Ltot and B >= 2 * sub and total_bytes >= (1 << 20):
        tr = _round_up(pl.cdiv(B, 2), sub)

    # Lane tiles are the OUTER grid axis so the weight block index changes only
    # per outer step (Pallas skips the re-DMA while it is unchanged).
    grid = (pl.cdiv(Ltot, tl), pl.cdiv(B, tr))

    extra_kwargs = {}
    if alias_input and out_dtype == x.dtype:
        # Reuse x2's HBM buffer for the output (caller guarantees x is dead).
        extra_kwargs["input_output_aliases"] = {1: 0}

    out2 = pl.pallas_call(
        _weight_layer_kernel,
        out_shape=jax.ShapeDtypeStruct((B, Ltot), out_dtype),
        grid_spec=pltpu.PrefetchScalarGridSpec(
            num_scalar_prefetch=0,
            grid=grid,
            in_specs=[
                # weight row: depends only on the (outer) lane-tile index
                pl.BlockSpec((1, tl), lambda j, i: (0, j)),
                # x: (row tile, lane tile)
                pl.BlockSpec((tr, tl), lambda j, i: (i, j)),
            ],
            out_specs=pl.BlockSpec((tr, tl), lambda j, i: (i, j)),
        ),
        compiler_params=pltpu.CompilerParams(
            dimension_semantics=("parallel", "parallel"),
            # in + out tiles (<= ~4 MiB each) x double-buffering + weight row
            # stays well under 32 MiB -> safe on v5e/v6e/v7x scoped VMEM.
            vmem_limit_bytes=32 * 1024 * 1024,
        ),
        **extra_kwargs,
    )(w_row, x2)

    return out2.reshape(B, C, L)


if __name__ == "__main__":
    # Small shapes consistent with the module: (batch=2, in_dim=8, seq=16)
    B, C, L = 2, 8, 16

    key = jax.random.PRNGKey(0)
    k_w, k_b, k_x = jax.random.split(key, 3)

    # Deterministic init mirroring reset_parameters():
    #   weight ~ U(0, 1/in_dim)
    #   bias   ~ U(-1/sqrt(in_dim), 1/sqrt(in_dim))  (exists but unused in forward)
    w_bound = 1.0 / C
    weight = jax.random.uniform(k_w, (C,), jnp.float32, 0.0, w_bound)
    b_bound = 1.0 / math.sqrt(C)
    bias = jax.random.uniform(k_b, (C,), jnp.float32, -b_bound, b_bound)  # unused, per PyTorch forward

    x = jax.random.normal(k_x, (B, C, L), jnp.float32)

    out = jax.block_until_ready(weight_layer(x, weight))

    # Reference check (plain JAX): out = x * w + w  (broadcast over B, L)
    ref = x * weight[None, :, None] + weight[None, :, None]
    assert out.shape == ref.shape, "shape mismatch vs reference"
    assert jnp.allclose(out, ref, atol=1e-6), "mismatch vs reference"

    print("KERNEL_OK")
</pallas_src>

<mosaic_0001>
module attributes {stable_mosaic.version = 11 : i64} {
  func.func @_weight_layer_kernel(%arg0: i32, %arg1: i32, %arg2: memref<1x128xf32, #tpu.memory_space<vmem>>, %arg3: memref<2x128xf32, #tpu.memory_space<vmem>>, %arg4: memref<2x128xf32, #tpu.memory_space<vmem>>) attributes {dimension_semantics = [#tpu.dimension_semantics<parallel>, #tpu.dimension_semantics<parallel>], iteration_bounds = array<i64: 1, 1>, scalar_prefetch = 0 : i64, scratch_operands = 0 : i64, tpu.core_type = #tpu.core_type<tc>, window_params = [{transform_indices = @transform_0, window_bounds = array<i64: 1, 128>}, {transform_indices = @transform_1, window_bounds = array<i64: 2, 128>}, {transform_indices = @transform_2, window_bounds = array<i64: 2, 128>}]} {
    %c0 = arith.constant 0 : index
    %c0_0 = arith.constant 0 : index
    %0 = vector.load %arg2[%c0, %c0_0] : memref<1x128xf32, #tpu.memory_space<vmem>>, vector<1x128xf32>
    %c0_1 = arith.constant 0 : index
    %c0_2 = arith.constant 0 : index
    %1 = vector.load %arg3[%c0_1, %c0_2] : memref<2x128xf32, #tpu.memory_space<vmem>>, vector<2x128xf32>
    %2 = vector.broadcast %0 : vector<1x128xf32> to vector<2x128xf32>
    %3 = arith.mulf %1, %2 : vector<2x128xf32>
    %4 = vector.broadcast %0 : vector<1x128xf32> to vector<2x128xf32>
    %5 = arith.addf %3, %4 : vector<2x128xf32>
    %c0_3 = arith.constant 0 : index
    %c0_4 = arith.constant 0 : index
    %6 = vector.load %arg4[%c0_3, %c0_4] : memref<2x128xf32, #tpu.memory_space<vmem>>, vector<2x128xf32>
    tpu.vector_store %arg4[%c0_3, %c0_4], %5 {strides = array<i32>} : memref<2x128xf32, #tpu.memory_space<vmem>>, vector<2x128xf32>,
    return
  }
  func.func @transform_0(%arg0: i32, %arg1: i32) -> (i32, i32) {
    %c0_i32 = arith.constant 0 : i32
    %c0_i32_0 = arith.constant 0 : i32
    return %c0_i32, %arg0 : i32, i32
  }
  func.func @transform_1(%arg0: i32, %arg1: i32) -> (i32, i32) {
    %c0_i32 = arith.constant 0 : i32
    return %arg1, %arg0 : i32, i32
  }
  func.func @transform_2(%arg0: i32, %arg1: i32) -> (i32, i32) {
    %c0_i32 = arith.constant 0 : i32
    return %arg1, %arg0 : i32, i32
  }
}

</mosaic_0001>

<llo_original>
// kernel: tpu_custom_call.1
$region0: #{tpu_custom_call.1}
  #allocation0 [shape = 'u32[]', space=smem, size = 0x4, offset = 0x4, fixed_abs, tag = 'smem constant byte address 0x4 - core index']
  #allocation1 [shape = 'u32[144,128]{1,0:T(1,128)}', space=vmem, size = 0x12000, scoped, tag = 'internal scratch']
  %s0 = inlined_call_operand.hbm [shape: f32[1,128], index: 0, kind: input, shape index: {}]
  %s1 = inlined_call_operand.hbm [shape: f32[2,128], index: 1, kind: input, shape index: {}]
  %s2 = inlined_call_operand.hbm [shape: f32[2,128], index: 2, kind: output, shape index: {}]
  %s3 = sld [smem:[#allocation0]]
  $region26: #{tpu_custom_call.1} parent=0
    _
  %s5 = ssub.s32 1, %s3
  %s6 = scalar_select 0, %s5, %s3
  $region1: #{tpu_custom_call.1} parent=0
    #allocation2 [shape = 'u8[512]{0}', space=vmem, size = 0x400, scoped, tag = 'input window, operand 0, single buffered']
    #allocation3 [shape = 's32[1]{0}', space=sflag, size = 0x4, scoped, tag = 'scoped memory for tpu_custom_call.1']
    #allocation4 [shape = 's32[1]{0}', space=sflag, size = 0x4, scoped, tag = 'scoped memory for tpu_custom_call.1']
    #allocation5 [shape = 'u8[1024]{0}', space=vmem, size = 0x400, scoped, tag = 'input window, operand 1, single buffered']
    #allocation6 [shape = 's32[1]{0}', space=sflag, size = 0x4, scoped, tag = 'scoped memory for tpu_custom_call.1']
    #allocation7 [shape = 'u8[1024]{0}', space=vmem, size = 0x400, scoped, tag = 'output window, operand 0, single buffered']
    %7 = vsyncpa [#allocation3], 0
    %8 = vsyncpa [#allocation6], 0
    %9 = vsyncpa [#allocation4], 0
    // Predicated region
    $region2: #{tpu_custom_call.1} parent=1 // pred_check
      _
    $region3: #{tpu_custom_call.1} parent=1 // pred_check_branch
      %11 = sbr.rel (0) target = $region5
    $region4: #{tpu_custom_call.1} parent=1 // pred_region
      %s13 = ssub.s32 16, 16
      %14 = vsyncadd [#allocation3], %s13
      %s16 = sshll.u32 [#allocation2], 4
      %s17 = int_to_ptr.vmem [resolvable:$true] %s16
      %19 = dma.hbm_to_vmem [thread:$0]  %s0, 16, %s17, [#allocation3]
    $region5: #{tpu_custom_call.1} parent=1 // pred_fallthru
      _
    // Predicated region
    $region6: #{tpu_custom_call.1} parent=1 // pred_check
      _
    $region7: #{tpu_custom_call.1} parent=1 // pred_check_branch
      %21 = sbr.rel (0) target = $region9
    $region8: #{tpu_custom_call.1} parent=1 // pred_region
      %s23 = ssub.s32 32, 32
      %24 = vsyncadd [#allocation6], %s23
      %s26 = sshll.u32 [#allocation5], 4
      %s27 = int_to_ptr.vmem [resolvable:$true] %s26
      %29 = dma.hbm_to_vmem [thread:$0]  %s1, 32, %s27, [#allocation6]
    $region9: #{tpu_custom_call.1} parent=1 // pred_fallthru
      _
    // Predicated region
    $region10: #{tpu_custom_call.1} parent=1 // pred_check
      _
    $region11: #{tpu_custom_call.1} parent=1 // pred_check_branch
      %31 = sbr.rel (0) target = $region13
    $region12: #{tpu_custom_call.1} parent=1 // pred_region
      %32 = dma.done [#allocation3], 16
    $region13: #{tpu_custom_call.1} parent=1 // pred_fallthru
      _
    // Predicated region
    $region14: #{tpu_custom_call.1} parent=1 // pred_check
      _
    $region15: #{tpu_custom_call.1} parent=1 // pred_check_branch
      %34 = sbr.rel (0) target = $region17
    $region16: #{tpu_custom_call.1} parent=1 // pred_region
      %35 = dma.done [#allocation6], 32
    $region17: #{tpu_custom_call.1} parent=1 // pred_fallthru
      _
    %v36 = vld [vmem:[#allocation2] sm:$0x1]
    %v37 = vld [vmem:[#allocation5] sm:$0x3]
    %v39 = vlaneseq
    %v40 = vshrl.u32 %v39, 7
    %v41 = vsub.s32 0, %v40
    %v42 = vrot.slane %v36, %v41
    %v44 = vmul.f32 %v37, %v42
    %v45 = vadd.f32 %v44, %v42
    %46 = vst [vmem:[#allocation7] sm:$0x3] %v45
    // Predicated region
    $region18: #{tpu_custom_call.1} parent=1 // pred_check
      _
    $region19: #{tpu_custom_call.1} parent=1 // pred_check_branch
      %48 = sbr.rel (0) target = $region21
    $region20: #{tpu_custom_call.1} parent=1 // pred_region
      %s50 = ssub.s32 32, 32
      %51 = vsyncadd [#allocation4], %s50
      %s53 = sshll.u32 [#allocation7], 4
      %s54 = int_to_ptr.vmem [resolvable:$true] %s53
      %56 = dma.vmem_to_hbm [thread:$0]  %s54, 32, %s2, [#allocation4]
    $region21: #{tpu_custom_call.1} parent=1 // pred_fallthru
      _
    // Predicated region
    $region22: #{tpu_custom_call.1} parent=1 // pred_check
      _
    $region23: #{tpu_custom_call.1} parent=1 // pred_check_branch
      %58 = sbr.rel (0) target = $region25
    $region24: #{tpu_custom_call.1} parent=1 // pred_region
      %59 = dma.done [#allocation4], 32
    $region25: #{tpu_custom_call.1} parent=1 // pred_fallthru
      _
    %60 = vsyncpa [#allocation3], 1
    %61 = vsyncpa [#allocation6], 1
    %62 = vsyncpa [#allocation4], 1

</llo_original>
